<compile_context>
chip_gen: v7x
topology: tpu7x:2x2x1
jax: 0.10.0
libtpu: 0.0.40
codegen_flags: <defaults>
</compile_context>

<pallas_src>
import numpy as np
import jax
import jax.numpy as jnp
from jax.experimental import pallas as pl
from jax.experimental.pallas import tpu as pltpu

_EPS_ = 1e-6
_SQRT_EPS_ = float(np.sqrt(np.float32(_EPS_)))  # sqrt(clamp(0, min=eps)) for one-hot zeros


def _sphere_z_kernel(x_ref, t_ref, z_ref):
    """Per row: z = <to_sphere(softmax(x)), to_sphere(one_hot(t))>, clamped.

    x_ref: (R, C) logits block (native dtype, cast to f32 here)
    t_ref: (R, 1) i32 class-id block
    z_ref: (R, 1) f32 clamped inner product
    """
    x = x_ref[...].astype(jnp.float32)                        # (R, C)

    # Fused sqrt-softmax: sqrt(max(softmax(x), eps)) = max(h * rsqrt(sum h^2), sqrt(eps))
    m = jnp.max(x, axis=1, keepdims=True)
    h = jnp.exp(0.5 * (x - m))                                # only EUP op per element
    s = jnp.sum(h * h, axis=1, keepdims=True)                 # = sum(exp(x - m)) per row
    a = jnp.maximum(h * jax.lax.rsqrt(s), _SQRT_EPS_)         # (R, C)

    # TODO(synk): PyTorch NaN guard (print + quit()) has no in-kernel equivalent;
    # softmax of finite inputs is never NaN so it is omitted.

    # One-hot sphere map folded + single fused lane reduction:
    #   b[j] = 1.0 at the target column, sqrt(eps) elsewhere
    #   => z = sum_j a[j] * w[j],  w[j] = where(j == t, 1, sqrt(eps))
    col_ids = jax.lax.broadcasted_iota(jnp.int32, x.shape, 1)  # (R, C)
    w = jnp.where(col_ids == t_ref[...], 1.0, _SQRT_EPS_)      # (R, C) f32
    z = jnp.sum(a * w, axis=1, keepdims=True)                  # (R, 1)

    z_ref[...] = jnp.clip(z, _EPS_ - 1.0, 1.0 - _EPS_)


def _sublane_multiple(dtype) -> int:
    """Sublane packing multiple: 8 for 32-bit, 16 for bf16, 32 for 8-bit."""
    itemsize = jnp.dtype(dtype).itemsize
    return max(8, 32 // max(1, itemsize))


def sphere_loss(logits, target):
    """logits: [N, C] (any float dtype), target: [N] int.

    Returns the scalar acos(z)[0, 0], exactly like SphereLoss.forward.
    Only the first sublane tile of rows is ever read (row 0 is the only row
    whose result is consumed), so this is a single-block, grid=(1,) kernel.
    """
    N, C = logits.shape
    itemsize = jnp.dtype(logits.dtype).itemsize
    rb = _sublane_multiple(logits.dtype)      # 8 rows for f32, 16 for bf16

    x = logits                                 # native dtype; cast in-kernel
    t = target.astype(jnp.int32)
    if N < rb:                                 # tiny pad only when batch < one sublane tile
        x = jnp.pad(x, ((0, rb - N), (0, 0)))
        t = jnp.pad(t, (0, rb - N))
        n_rows = rb
    else:
        n_rows = N                             # no slice/pad: kernel DMAs only block (0, 0)
    t2 = t.reshape(n_rows, 1)

    z = pl.pallas_call(
        _sphere_z_kernel,
        out_shape=jax.ShapeDtypeStruct((rb, 1), jnp.float32),
        grid=(1,),
        in_specs=[
            pl.BlockSpec((rb, C), lambda i: (0, 0)),
            pl.BlockSpec((rb, 1), lambda i: (0, 0)),
        ],
        out_specs=pl.BlockSpec((rb, 1), lambda i: (0, 0)),
        compiler_params=pltpu.CompilerParams(
            dimension_semantics=("arbitrary",)),
        cost_estimate=pl.CostEstimate(
            flops=8 * rb * C,
            transcendentals=rb * C,
            bytes_accessed=rb * C * itemsize + rb * 8),
    )(x, t2)

    # The module returns acos(z)[0, 0]: index first so the arccos is a single
    # scalar op in the XLA epilogue (no Mosaic arccos lowering needed).
    return jnp.arccos(z[0, 0])


def sphere_geodesic_distances(logits, target, *, tile_n=None):
    """Full per-row path (kept for when per-row distances are needed).

    Returns acos(z) of shape (N, 1) — one geodesic distance per row.
    """
    N, C = logits.shape
    itemsize = jnp.dtype(logits.dtype).itemsize
    sub = _sublane_multiple(logits.dtype)

    # Tile size from a ~4 MiB per-input-buffer budget (double-buffered input
    # stays under every generation's scoped-VMEM default; v6e could go larger
    # but this is within a few % at multi-MiB tiles).
    budget = 4 * 1024 * 1024
    max_rows = max(sub, (budget // max(1, C * itemsize)) // sub * sub)
    if tile_n is None:
        tile_n = max_rows                      # default to the VMEM-derived cap
    tile_n = max(sub, min(int(tile_n), max_rows))
    tile_n = -(-tile_n // sub) * sub
    if N <= tile_n:
        tile_n = max(sub, -(-N // sub) * sub)
    num_tiles = pl.cdiv(N, tile_n)
    # v7x has 2 TensorCores: give the "parallel" axis >= 2 tiles when N allows.
    if num_tiles == 1 and N >= 2 * sub:
        tile_n = max(sub, -(-(N // 2) // sub) * sub)
        num_tiles = pl.cdiv(N, tile_n)

    x = logits                                 # native dtype; no host pad (ragged last
    t2 = target.astype(jnp.int32).reshape(N, 1)  # block: OOB reads padded, stores masked)

    # NOTE: the (tile_n, 1) output lowers to 1-active-lane masked stores; that
    # traffic is 1/C of the input read, negligible for C >= ~64.
    z = pl.pallas_call(
        _sphere_z_kernel,
        out_shape=jax.ShapeDtypeStruct((N, 1), jnp.float32),
        grid=(num_tiles,),
        in_specs=[
            pl.BlockSpec((tile_n, C), lambda i: (i, 0)),
            pl.BlockSpec((tile_n, 1), lambda i: (i, 0)),
        ],
        out_specs=pl.BlockSpec((tile_n, 1), lambda i: (i, 0)),
        compiler_params=pltpu.CompilerParams(
            dimension_semantics=("parallel",)),
        cost_estimate=pl.CostEstimate(
            flops=8 * N * C,
            transcendentals=N * C,
            bytes_accessed=N * C * itemsize + N * 8),
    )(x, t2)
    return jnp.arccos(z)


def _reference_scalar(logits, target):
    """Pure-JAX reference of the PyTorch forward (scalar)."""
    return _reference_per_row(logits, target)[0, 0]


def _reference_per_row(logits, target):
    sm = jax.nn.softmax(logits.astype(jnp.float32), axis=1)
    oh = jax.nn.one_hot(target, logits.shape[1], dtype=jnp.float32)
    a = jnp.sqrt(jnp.maximum(sm, _EPS_))
    b = jnp.sqrt(jnp.maximum(oh, _EPS_))
    z = jnp.clip(jnp.sum(a * b, axis=-1)[..., None], _EPS_ - 1.0, 1.0 - _EPS_)
    return jnp.arccos(z)


if __name__ == "__main__":
    key = jax.random.PRNGKey(0)
    k1, k2, k3, k4 = jax.random.split(key, 4)

    # --- main path: small batch of f32 logits over 16 classes ---------------
    N, C = 8, 16
    logits = jax.random.normal(k1, (N, C), dtype=jnp.float32)
    target = jax.random.randint(k2, (N,), 0, C, dtype=jnp.int32)

    out = sphere_loss(logits, target)
    jax.block_until_ready(out)
    ref = _reference_scalar(logits, target)
    assert out.shape == ()                      # scalar, like the module's [0, 0] index
    assert jnp.allclose(out, ref, atol=1e-5, rtol=1e-5), (out, ref)

    # --- native bf16 input (no host upcast; in-kernel cast) ------------------
    logits_bf16 = logits.astype(jnp.bfloat16)
    out_bf16 = sphere_loss(logits_bf16, target)
    jax.block_until_ready(out_bf16)
    ref_bf16 = _reference_scalar(logits_bf16, target)
    assert jnp.allclose(out_bf16, ref_bf16, atol=1e-5, rtol=1e-5), (out_bf16, ref_bf16)

    # --- per-row path: ragged grid (N not a multiple of the tile) ------------
    N2 = 20
    logits2 = jax.random.normal(k3, (N2, C), dtype=jnp.float32)
    target2 = jax.random.randint(k4, (N2,), 0, C, dtype=jnp.int32)
    d = sphere_geodesic_distances(logits2, target2)
    jax.block_until_ready(d)
    d_ref = _reference_per_row(logits2, target2)
    assert d.shape == (N2, 1)
    assert jnp.allclose(d, d_ref, atol=1e-5, rtol=1e-5), (d, d_ref)

    print("KERNEL_OK")
</pallas_src>

<mosaic_0001>
module attributes {stable_mosaic.version = 11 : i64} {
  func.func @_sphere_z_kernel(%arg0: i32, %arg1: memref<8x16xf32, #tpu.memory_space<vmem>>, %arg2: memref<8x1xi32, #tpu.memory_space<vmem>>, %arg3: memref<8x1xf32, #tpu.memory_space<vmem>>) attributes {dimension_semantics = [#tpu.dimension_semantics<arbitrary>], iteration_bounds = array<i64: 1>, scalar_prefetch = 0 : i64, scratch_operands = 0 : i64, tpu.core_type = #tpu.core_type<tc>, window_params = [{pipeline_mode = #tpu.pipeline_mode<synchronous>, transform_indices = @transform_0, window_bounds = array<i64: 8, 16>}, {pipeline_mode = #tpu.pipeline_mode<synchronous>, transform_indices = @transform_1, window_bounds = array<i64: 8, 1>}, {pipeline_mode = #tpu.pipeline_mode<synchronous>, transform_indices = @transform_2, window_bounds = array<i64: 8, 1>}]} {
    %c0 = arith.constant 0 : index
    %c0_0 = arith.constant 0 : index
    %0 = vector.load %arg1[%c0, %c0_0] : memref<8x16xf32, #tpu.memory_space<vmem>>, vector<8x16xf32>
    %cst = arith.constant dense<0xFF800000> : vector<8xf32>
    %1 = vector.multi_reduction <maximumf>, %0, %cst [1] : vector<8x16xf32> to vector<8xf32>
    %2 = vector.shape_cast %1 : vector<8xf32> to vector<8x1xf32>
    %3 = vector.broadcast %2 : vector<8x1xf32> to vector<8x16xf32>
    %4 = arith.subf %0, %3 : vector<8x16xf32>
    %cst_1 = arith.constant 5.000000e-01 : f32
    %5 = vector.broadcast %cst_1 : f32 to vector<8x16xf32>
    %6 = arith.mulf %5, %4 : vector<8x16xf32>
    %7 = math.exp %6 : vector<8x16xf32>
    %8 = arith.mulf %7, %7 : vector<8x16xf32>
    %cst_2 = arith.constant dense<0.000000e+00> : vector<8xf32>
    %9 = vector.multi_reduction <add>, %8, %cst_2 [1] : vector<8x16xf32> to vector<8xf32>
    %10 = vector.shape_cast %9 : vector<8xf32> to vector<8x1xf32>
    %11 = math.rsqrt %10 : vector<8x1xf32>
    %12 = vector.broadcast %11 : vector<8x1xf32> to vector<8x16xf32>
    %13 = arith.mulf %7, %12 : vector<8x16xf32>
    %cst_3 = arith.constant 1.000000e-03 : f32
    %14 = vector.broadcast %cst_3 : f32 to vector<8x16xf32>
    %15 = arith.maximumf %13, %14 : vector<8x16xf32>
    %16 = tpu.iota {dimensions = array<i32: 1>} : vector<8x16xi32>
    %c0_4 = arith.constant 0 : index
    %c0_5 = arith.constant 0 : index
    %17 = vector.load %arg2[%c0_4, %c0_5] : memref<8x1xi32, #tpu.memory_space<vmem>>, vector<8x1xi32>
    %18 = vector.broadcast %17 : vector<8x1xi32> to vector<8x16xi32>
    %19 = arith.cmpi eq, %16, %18 : vector<8x16xi32>
    %cst_6 = arith.constant 1.000000e+00 : f32
    %cst_7 = arith.constant 1.000000e-03 : f32
    %20 = vector.broadcast %cst_6 : f32 to vector<8x16xf32>
    %21 = vector.broadcast %cst_7 : f32 to vector<8x16xf32>
    %22 = arith.select %19, %20, %21 : vector<8x16xi1>, vector<8x16xf32>
    %23 = arith.mulf %15, %22 : vector<8x16xf32>
    %cst_8 = arith.constant dense<0.000000e+00> : vector<8xf32>
    %24 = vector.multi_reduction <add>, %23, %cst_8 [1] : vector<8x16xf32> to vector<8xf32>
    %25 = vector.shape_cast %24 : vector<8xf32> to vector<8x1xf32>
    %cst_9 = arith.constant -0.999998986 : f32
    %cst_10 = arith.constant 0.999998986 : f32
    %26 = vector.broadcast %cst_9 : f32 to vector<8x1xf32>
    %27 = arith.maximumf %26, %25 : vector<8x1xf32>
    %28 = vector.broadcast %cst_10 : f32 to vector<8x1xf32>
    %29 = arith.minimumf %28, %27 : vector<8x1xf32>
    %c0_11 = arith.constant 0 : index
    %c0_12 = arith.constant 0 : index
    %30 = vector.load %arg3[%c0_11, %c0_12] : memref<8x1xf32, #tpu.memory_space<vmem>>, vector<8x1xf32>
    tpu.vector_store %arg3[%c0_11, %c0_12], %29 {strides = array<i32>} : memref<8x1xf32, #tpu.memory_space<vmem>>, vector<8x1xf32>,
    return
  }
  func.func @transform_0(%arg0: i32) -> (i32, i32) {
    %c0_i32 = arith.constant 0 : i32
    %c0_i32_0 = arith.constant 0 : i32
    %c0_i32_1 = arith.constant 0 : i32
    return %c0_i32, %c0_i32_0 : i32, i32
  }
  func.func @transform_1(%arg0: i32) -> (i32, i32) {
    %c0_i32 = arith.constant 0 : i32
    %c0_i32_0 = arith.constant 0 : i32
    %c0_i32_1 = arith.constant 0 : i32
    return %c0_i32, %c0_i32_0 : i32, i32
  }
  func.func @transform_2(%arg0: i32) -> (i32, i32) {
    %c0_i32 = arith.constant 0 : i32
    %c0_i32_0 = arith.constant 0 : i32
    %c0_i32_1 = arith.constant 0 : i32
    return %c0_i32, %c0_i32_0 : i32, i32
  }
}

</mosaic_0001>

<llo_original>
// kernel: tpu_custom_call.1
$region0: #{tpu_custom_call.1}
  #allocation0 [shape = 'u32[]', space=smem, size = 0x4, offset = 0x4, fixed_abs, tag = 'smem constant byte address 0x4 - core index']
  #allocation1 [shape = 'u32[144,128]{1,0:T(1,128)}', space=vmem, size = 0x12000, scoped, tag = 'internal scratch']
  %s0 = inlined_call_operand.vmem [shape: f32[8,16], index: 0, kind: input, shape index: {}]
  %s1 = inlined_call_operand.vmem [shape: s32[8,1], index: 1, kind: input, shape index: {}]
  %s2 = inlined_call_operand.vmem [shape: f32[8,1], index: 2, kind: output, shape index: {}]
  %s3 = sld [smem:[#allocation0]]
  $region18: #{tpu_custom_call.1} parent=0
    _
  %s5 = ssub.s32 1, %s3
  %s6 = scalar_select 0, %s5, %s3
  // Predicated region
  $region2: #{tpu_custom_call.1} parent=0 // pred_check
    _
  $region3: #{tpu_custom_call.1} parent=0 // pred_check_branch
    %8 = sbr.rel (0) target = $region5
  $region4: #{tpu_custom_call.1} parent=0 // pred_region
    _
  $region5: #{tpu_custom_call.1} parent=0 // pred_fallthru
    _
  // Predicated region
  $region6: #{tpu_custom_call.1} parent=0 // pred_check
    _
  $region7: #{tpu_custom_call.1} parent=0 // pred_check_branch
    %10 = sbr.rel (0) target = $region9
  $region8: #{tpu_custom_call.1} parent=0 // pred_region
    _
  $region9: #{tpu_custom_call.1} parent=0 // pred_fallthru
    _
  %v11 = vld [vmem:[%s0] sm:$0xff]
  %vm12 = vcmask 130048
  %v13 = vsel %vm12, %v11, -inf
  %14 = vmax.xlane.f32.xlu0 %v13
  %v15 = vpop.xlane.xlu0 %14
  %v16 = vsub.f32 %v11, %v15
  %v17 = vmul.f32 %v16, 0.5
  %v18 = vmul.f32 %v17, 1.442695
  %v19 = vpow.pop %v18
  %v20 = vmul.f32 %v19, %v19
  %v21 = vsel %vm12, %v20, 0.0
  %22 = vadd.xlane.f32.xlu0 %v21
  %v23 = vpop.xlane.xlu0 %22
  %v24 = vrsqrt.pop %v23
  %v25 = vmul.f32 %v19, %v24
  %v26 = vmax.f32 %v25, 0.001
  %v27 = vlaneseq
  %v28 = vand.u32 %v27, 127
  %v29 = vld [vmem:[%s1] sm:$0xff]
  %30 = vset.pattern.permute.xlu0 0
  %31 = vperm.xlu0 %30, %v29
  %v32 = vpop.permute.xlu0 %31
  %vm33 = vcmp.eq.s32.totalorder %v28, %v32
  %v34 = vsel %vm33, 1.0, 0.001
  %v35 = vmul.f32 %v26, %v34
  %v36 = vsel %vm12, %v35, 0.0
  %37 = vadd.xlane.f32.xlu0 %v36
  %v38 = vpop.xlane.xlu0 %37
  %v39 = vmax.f32 %v38, -0.999999
  %v40 = vmin.f32 %v39, 0.999999
  %vm41 = vcmask 7168
  %42 = vst.msk [vmem:[%s2] sm:$0xff] %vm41, %v40
  // Predicated region
  $region10: #{tpu_custom_call.1} parent=0 // pred_check
    _
  $region11: #{tpu_custom_call.1} parent=0 // pred_check_branch
    %44 = sbr.rel (0) target = $region13
  $region12: #{tpu_custom_call.1} parent=0 // pred_region
    _
  $region13: #{tpu_custom_call.1} parent=0 // pred_fallthru
    _
  // Predicated region
  $region14: #{tpu_custom_call.1} parent=0 // pred_check
    _
  $region15: #{tpu_custom_call.1} parent=0 // pred_check_branch
    %46 = sbr.rel (0) target = $region17
  $region16: #{tpu_custom_call.1} parent=0 // pred_region
    _
  $region17: #{tpu_custom_call.1} parent=0 // pred_fallthru
    _

</llo_original>
